<compile_context>
chip_gen: v5e
topology: v5e:2x2
jax: 0.10.0
libtpu: 0.0.40
codegen_flags: <defaults>
</compile_context>

<pallas_src>
import jax
import jax.numpy as jnp
from jax.experimental import pallas as pl
from jax.experimental.pallas import tpu as pltpu


# ----------------------------- kernels ------------------------------------ #

def _value_head_n1_kernel(x_ref, w_ref, b_ref, o_ref):
    """num == 1 path: VPU multiply + lane reduce, scalar bias from SMEM."""
    x = x_ref[...]                                   # (tb, D)  VMEM
    w = w_ref[...]                                   # (1,  D)  VMEM, sublane-bcast
    acc = jnp.sum(x * w, axis=-1, keepdims=True)     # (tb, 1)  f32 reduce (XLU)
    o_ref[...] = (acc + b_ref[0]).astype(o_ref.dtype)


def _value_mxu_kernel(x_ref, wt_ref, b_ref, o_ref):
    """General num > 1 path: plain MXU matmul with pre-transposed weight.
    (For large D/N on v6e/v7x, cast x/wt to bf16 here and keep the f32
    accumulator via preferred_element_type.)"""
    acc = jnp.dot(x_ref[...], wt_ref[...], preferred_element_type=jnp.float32)
    o_ref[...] = (acc + b_ref[...]).astype(o_ref.dtype)


# ----------------------------- wrapper ------------------------------------ #

def norm_col_init(key, shape, std=0.1):
    """tom2c norm_col_init: row-wise normalized Gaussian * std."""
    x = jax.random.normal(key, shape, dtype=jnp.float32)
    denom = jnp.sqrt(jnp.sum(x * x, axis=1, keepdims=True))
    return x * (std / denom)


def init_value_net_params(key, input_dim, num=1):
    """Deterministic init (non-noisy branch). Weight is pre-transposed ONCE
    here so the forward wrapper never pays a per-call transpose."""
    weight = norm_col_init(key, (num, input_dim), std=0.1)   # (num, D)
    return {
        "weight": weight,                      # (N, D) -- torch layout
        "weight_t": weight.T,                  # (D, N) -- for the MXU path
        "bias": jnp.zeros((num,), jnp.float32),
    }


def value_net_forward(params, x, *, block_b=1024):
    """x: (B, input_dim) f32 -> (B, num) f32."""
    weight = params["weight"]                  # (N, D)
    weight_t = params["weight_t"]              # (D, N)
    bias = params["bias"]                      # (N,)
    B, D = x.shape
    N = weight.shape[0]

    # Batch tiling: one full-array block when small, else 8-aligned tiles
    # (pad batch, slice back).  v7x note: tile VMEM budget = 2 bufs * tb*D*4B,
    # which stays tiny here; raise vmem_limit_bytes only if D grows a lot.
    if B <= block_b:
        tb, Bp = B, B
    else:
        tb = max(8, (block_b // 8) * 8)
        Bp = int(pl.cdiv(B, tb)) * tb
    x_p = x if Bp == B else jnp.pad(x, ((0, Bp - B), (0, 0)))
    grid = (Bp // tb,)
    cparams = pltpu.CompilerParams(dimension_semantics=("parallel",))

    if N == 1:
        out = pl.pallas_call(
            _value_head_n1_kernel,
            out_shape=jax.ShapeDtypeStruct((Bp, 1), x.dtype),
            grid=grid,
            in_specs=[
                pl.BlockSpec((tb, D), lambda i: (i, 0)),
                pl.BlockSpec((1, D), lambda i: (0, 0)),
                pl.BlockSpec(memory_space=pltpu.MemorySpace.SMEM),   # bias scalar
            ],
            out_specs=pl.BlockSpec((tb, 1), lambda i: (i, 0)),
            compiler_params=cparams,
        )(x_p, weight.reshape(1, D), bias)
    else:
        out = pl.pallas_call(
            _value_mxu_kernel,
            out_shape=jax.ShapeDtypeStruct((Bp, N), x.dtype),
            grid=grid,
            in_specs=[
                pl.BlockSpec((tb, D), lambda i: (i, 0)),
                pl.BlockSpec((D, N), lambda i: (0, 0)),
                pl.BlockSpec((1, N), lambda i: (0, 0)),
            ],
            out_specs=pl.BlockSpec((tb, N), lambda i: (i, 0)),
            compiler_params=cparams,
        )(x_p, weight_t, bias.reshape(1, N))

    return out[:B] if Bp != B else out


# ------------------------------- test -------------------------------------- #

if __name__ == "__main__":
    key = jax.random.PRNGKey(0)
    k_x, k_w, k_x2, k_w2 = jax.random.split(key, 4)

    batch, input_dim, num = 8, 32, 1
    params = init_value_net_params(k_w, input_dim, num)
    x = jax.random.normal(k_x, (batch, input_dim), dtype=jnp.float32)

    # Default (num == 1, single-block) path.
    value = jax.block_until_ready(value_net_forward(params, x))
    ref = x @ params["weight"].T + params["bias"]
    assert value.shape == (batch, num)
    assert jnp.allclose(value, ref, atol=1e-5), "mismatch (n1 path)"

    # Exercise the tiled "parallel" grid path (batch padded 20 -> 24, grid=3).
    x_big = jax.random.normal(k_x2, (20, input_dim), dtype=jnp.float32)
    v_big = jax.block_until_ready(value_net_forward(params, x_big, block_b=8))
    ref_big = x_big @ params["weight"].T + params["bias"]
    assert v_big.shape == (20, 1)
    assert jnp.allclose(v_big, ref_big, atol=1e-5), "mismatch (tiled path)"

    # Exercise the general num > 1 MXU path.
    params4 = init_value_net_params(k_w2, input_dim, num=4)
    v4 = jax.block_until_ready(value_net_forward(params4, x))
    ref4 = x @ params4["weight"].T + params4["bias"]
    assert v4.shape == (batch, 4)
    assert jnp.allclose(v4, ref4, atol=1e-5), "mismatch (mxu path)"

    print("KERNEL_OK")
</pallas_src>

<mosaic_0001>
module attributes {stable_mosaic.version = 11 : i64} {
  func.func @_value_head_n1_kernel(%arg0: i32, %arg1: memref<8x32xf32, #tpu.memory_space<vmem>>, %arg2: memref<1x32xf32, #tpu.memory_space<vmem>>, %arg3: memref<1xf32, #tpu.memory_space<smem>>, %arg4: memref<8x1xf32, #tpu.memory_space<vmem>>) attributes {dimension_semantics = [#tpu.dimension_semantics<parallel>], iteration_bounds = array<i64: 1>, scalar_prefetch = 0 : i64, scratch_operands = 0 : i64, tpu.core_type = #tpu.core_type<tc>, window_params = [{transform_indices = @transform_0, window_bounds = array<i64: 8, 32>}, {pipeline_mode = #tpu.pipeline_mode<synchronous>, transform_indices = @transform_1, window_bounds = array<i64: 1, 32>}, {transform_indices = @transform_2, window_bounds = array<i64: 1>}, {transform_indices = @transform_3, window_bounds = array<i64: 8, 1>}]} {
    %c0 = arith.constant 0 : index
    %c0_0 = arith.constant 0 : index
    %0 = vector.load %arg1[%c0, %c0_0] : memref<8x32xf32, #tpu.memory_space<vmem>>, vector<8x32xf32>
    %c0_1 = arith.constant 0 : index
    %c0_2 = arith.constant 0 : index
    %1 = vector.load %arg2[%c0_1, %c0_2] : memref<1x32xf32, #tpu.memory_space<vmem>>, vector<1x32xf32>
    %2 = vector.broadcast %1 : vector<1x32xf32> to vector<8x32xf32>
    %3 = arith.mulf %0, %2 : vector<8x32xf32>
    %cst = arith.constant dense<0.000000e+00> : vector<8xf32>
    %4 = vector.multi_reduction <add>, %3, %cst [1] : vector<8x32xf32> to vector<8xf32>
    %5 = vector.shape_cast %4 : vector<8xf32> to vector<8x1xf32>
    %c0_3 = arith.constant 0 : index
    %6 = memref.load %arg3[%c0_3] : memref<1xf32, #tpu.memory_space<smem>>
    %7 = vector.broadcast %6 : f32 to vector<8x1xf32>
    %8 = arith.addf %5, %7 : vector<8x1xf32>
    %c0_4 = arith.constant 0 : index
    %c0_5 = arith.constant 0 : index
    %9 = vector.load %arg4[%c0_4, %c0_5] : memref<8x1xf32, #tpu.memory_space<vmem>>, vector<8x1xf32>
    tpu.vector_store %arg4[%c0_4, %c0_5], %8 {strides = array<i32>} : memref<8x1xf32, #tpu.memory_space<vmem>>, vector<8x1xf32>,
    return
  }
  func.func @transform_0(%arg0: i32) -> (i32, i32) {
    %c0_i32 = arith.constant 0 : i32
    %c0_i32_0 = arith.constant 0 : i32
    return %arg0, %c0_i32 : i32, i32
  }
  func.func @transform_1(%arg0: i32) -> (i32, i32) {
    %c0_i32 = arith.constant 0 : i32
    %c0_i32_0 = arith.constant 0 : i32
    %c0_i32_1 = arith.constant 0 : i32
    return %c0_i32, %c0_i32_0 : i32, i32
  }
  func.func @transform_2(%arg0: i32) -> i32 {
    %c0_i32 = arith.constant 0 : i32
    %c0_i32_0 = arith.constant 0 : i32
    return %c0_i32 : i32
  }
  func.func @transform_3(%arg0: i32) -> (i32, i32) {
    %c0_i32 = arith.constant 0 : i32
    %c0_i32_0 = arith.constant 0 : i32
    return %arg0, %c0_i32 : i32, i32
  }
}

</mosaic_0001>

<llo_original>
// kernel: tpu_custom_call.1
$region0: #{tpu_custom_call.1}
  #allocation0 [shape = 'u32[]', space=smem, size = 0x4, offset = 0x4, fixed_abs, tag = 'smem constant byte address 0x4 - core index']
  #allocation1 [shape = 'u32[72,128]{1,0:T(1,128)}', space=vmem, size = 0x9000, scoped, tag = 'internal scratch']
  #allocation2 [shape = 'f32[1]{0:T(128)S(6)}', space=smem, size = 0x200, scoped, tag = 'scoped memory for tpu_custom_call.1']
  %s0 = inlined_call_operand.hbm [shape: f32[8,32], index: 0, kind: input, shape index: {}]
  %s1 = inlined_call_operand.vmem [shape: f32[1,32], index: 1, kind: input, shape index: {}]
  %s2 = inlined_call_operand.<no memory space> [shape: f32[1], index: 2, kind: input, shape index: {}]
  %s3 = inlined_call_operand.vmem [shape: f32[8,1], index: 3, kind: output, shape index: {}]
  %s4 = sld [smem:[#allocation0]]
  $region26: #{tpu_custom_call.1} parent=0
    _
  %s6 = ssub.s32 1, %s4
  %s7 = scalar_select 0, %s6, %s4
  %8 = sst [smem:[#allocation2]] %s2
  $region1: #{tpu_custom_call.1} parent=0
    #allocation3 [shape = 'u8[4096]{0}', space=vmem, size = 0x1000, scoped, tag = 'input window, operand 0, single buffered']
    #allocation4 [shape = 's32[1]{0}', space=sflag, size = 0x4, scoped, tag = 'scoped memory for tpu_custom_call.1']
    %9 = vsyncpa [#allocation4], 0
    // Predicated region
    $region2: #{tpu_custom_call.1} parent=1 // pred_check
      _
    $region3: #{tpu_custom_call.1} parent=1 // pred_check_branch
      %11 = sbr.rel (0) target = $region5
    $region4: #{tpu_custom_call.1} parent=1 // pred_region
      %13 = vsyncadd [#allocation4], 0
      %s15 = sshll.u32 %s0, 4
      %s16 = int_to_ptr.hbm [resolvable:$true] %s15
      %s17 = sshll.u32 [#allocation3], 4
      %s18 = int_to_ptr.vmem [resolvable:$true] %s17
      %20 = dma.hbm_to_vmem [thread:$0]  %s16, 128, %s18, [#allocation4]
    $region5: #{tpu_custom_call.1} parent=1 // pred_fallthru
      _
    // Predicated region
    $region6: #{tpu_custom_call.1} parent=1 // pred_check
      _
    $region7: #{tpu_custom_call.1} parent=1 // pred_check_branch
      %22 = sbr.rel (0) target = $region9
    $region8: #{tpu_custom_call.1} parent=1 // pred_region
      _
    $region9: #{tpu_custom_call.1} parent=1 // pred_fallthru
      _
    // Predicated region
    $region10: #{tpu_custom_call.1} parent=1 // pred_check
      _
    $region11: #{tpu_custom_call.1} parent=1 // pred_check_branch
      %24 = sbr.rel (0) target = $region13
    $region12: #{tpu_custom_call.1} parent=1 // pred_region
      _
    $region13: #{tpu_custom_call.1} parent=1 // pred_fallthru
      _
    // Predicated region
    $region14: #{tpu_custom_call.1} parent=1 // pred_check
      _
    $region15: #{tpu_custom_call.1} parent=1 // pred_check_branch
      %26 = sbr.rel (0) target = $region17
    $region16: #{tpu_custom_call.1} parent=1 // pred_region
      %28 = dma.done [#allocation4], 128
    $region17: #{tpu_custom_call.1} parent=1 // pred_fallthru
      _
    %v29 = vld [vmem:[#allocation3] sm:$0xff]
    %v30 = vld [vmem:[%s1] sm:$0x1]
    %v32 = vperm.slane %v30, 0
    %v34 = vmul.f32 %v29, %v32
    %vm35 = vcmask 261120
    %v36 = vsel %vm35, %v34, 0.0
    %37 = vadd.xlane.f32.xlu0 %v36
    %v38 = vpop.xlane.xlu0 %37
    %s39 = sld [smem:[#allocation2]]
    %v40 = vstv %s39
    %v41 = vadd.f32 %v38, %v40
    %vm42 = vcmask 7168
    %43 = vst.msk [vmem:[%s3] sm:$0xff] %vm42, %v41
    // Predicated region
    $region18: #{tpu_custom_call.1} parent=1 // pred_check
      _
    $region19: #{tpu_custom_call.1} parent=1 // pred_check_branch
      %45 = sbr.rel (0) target = $region21
    $region20: #{tpu_custom_call.1} parent=1 // pred_region
      _
    $region21: #{tpu_custom_call.1} parent=1 // pred_fallthru
      _
    // Predicated region
    $region22: #{tpu_custom_call.1} parent=1 // pred_check
      _
    $region23: #{tpu_custom_call.1} parent=1 // pred_check_branch
      %47 = sbr.rel (0) target = $region25
    $region24: #{tpu_custom_call.1} parent=1 // pred_region
      _
    $region25: #{tpu_custom_call.1} parent=1 // pred_fallthru
      _
    %48 = vsyncpa [#allocation4], 1

</llo_original>
